<compile_context>
chip_gen: v7x
topology: tpu7x:2x2x1
jax: 0.10.0
libtpu: 0.0.40
codegen_flags: <defaults>
</compile_context>

<pallas_src>
import functools
import math

import jax
import jax.numpy as jnp
from jax.experimental import pallas as pl
from jax.experimental.pallas import tpu as pltpu

_LANE = 128


def _round_up(x, m):
    return ((x + m - 1) // m) * m


def _round_down(x, m):
    return (x // m) * m


def _sublane(dtype) -> int:
    # dtype-aware sublane packing: f32 -> 8, bf16/f16 -> 16, int8/fp8 -> 32.
    return max(8, 32 // jnp.dtype(dtype).itemsize)


def _padded_block_bytes(block_shape, dtype) -> int:
    """VMEM footprint of one block after (sublane, 128-lane) padding."""
    item = jnp.dtype(dtype).itemsize
    dims = list(block_shape)
    lane = _round_up(dims[-1], _LANE)
    sub = _round_up(dims[-2], _sublane(dtype)) if len(dims) >= 2 else 1
    lead = 1
    for d in dims[:-2]:
        lead *= d
    return lead * sub * lane * item


def _vmem_budget(target_override=None):
    """Return (target_input_block_bytes, physical_vmem_cap_bytes) for this generation."""
    cap = None
    try:
        info = pltpu.get_tpu_info()
        cap = int(getattr(info, "vmem_capacity_bytes", 0))
    except Exception:
        cap = None
    if not cap or cap <= 0:
        cap = 64 << 20                      # conservative: v7x per-TC VMEM
    if target_override is not None:
        return int(target_override), cap
    if cap >= (100 << 20):                  # v5e / v6e: 128 MiB physical VMEM
        return 8 << 20, cap
    return 6 << 20, cap                     # v7x: 64 MiB per TC -> modest resident footprint


def _vmem_limit_bytes(blocks, cap):
    """blocks: iterable of (block_shape, dtype, n_buffers). Adds pipeline + headroom."""
    total = sum(n * _padded_block_bytes(s, d) for (s, d, n) in blocks)
    limit = int(total * 1.3) + (2 << 20)    # ~30% + 2 MiB headroom for compiler scratch
    limit = max(limit, 16 << 20)
    limit = min(limit, cap - (4 << 20))
    return limit


# ----------------------------------------------------------------------------
# Kernels
# ----------------------------------------------------------------------------
def _sum_lane_chunks(x, t_r):
    """(t_out, t_r) -> (t_out, 128): add aligned 128-lane chunks (pure VPU, no XLU)."""
    acc = x[:, 0:_LANE]
    for c in range(1, t_r // _LANE):
        acc = acc + x[:, c * _LANE:(c + 1) * _LANE]
    return acc


def _mean_last_single_kernel(x_ref, o_ref, *, inv_r):
    """Whole reduction in one block: x (t_out, R) -> o (t_out, 1). No scratch."""
    x = x_ref[...].astype(jnp.float32)
    o_ref[...] = (jnp.sum(x, axis=1, keepdims=True) * inv_r).astype(o_ref.dtype)


def _mean_last_multi_kernel(x_ref, o_ref, acc_ref, *, inv_r, red, t_r, needs_mask):
    """Tiled last-axis reduction with a lane-dense (t_out, 128) f32 accumulator."""
    k = pl.program_id(1)
    n_k = pl.num_programs(1)

    @pl.when(k == 0)
    def _():
        acc_ref[...] = jnp.zeros_like(acc_ref)

    x = x_ref[...].astype(jnp.float32)

    if needs_mask:
        @pl.when(k < n_k - 1)
        def _():
            acc_ref[...] += _sum_lane_chunks(x, t_r)

        @pl.when(k == n_k - 1)
        def _():
            valid = red - k * t_r
            idx = jax.lax.broadcasted_iota(jnp.int32, x.shape, 1)
            acc_ref[...] += _sum_lane_chunks(jnp.where(idx < valid, x, 0.0), t_r)
    else:
        acc_ref[...] += _sum_lane_chunks(x, t_r)

    @pl.when(k == n_k - 1)
    def _():
        total = jnp.sum(acc_ref[...], axis=1, keepdims=True)   # single cross-lane collapse
        o_ref[...] = (total * inv_r).astype(o_ref.dtype)


def _mean_3d_single_kernel(x_ref, o_ref, *, inv_r):
    """Whole reduction in one block: x (t_out, R, t_in) -> o (t_out, t_in). No scratch."""
    x = x_ref[...].astype(jnp.float32)
    o_ref[...] = (jnp.sum(x, axis=1) * inv_r).astype(o_ref.dtype)


def _mean_3d_multi_kernel(x_ref, o_ref, acc_ref, *, inv_r, red, t_r, needs_mask):
    """Tiled reduction over axis 1 with an f32 accumulator (acc_ref may alias o_ref)."""
    k = pl.program_id(2)
    n_k = pl.num_programs(2)

    @pl.when(k == 0)
    def _():
        acc_ref[...] = jnp.zeros_like(acc_ref)

    x = x_ref[...].astype(jnp.float32)

    if needs_mask:
        @pl.when(k < n_k - 1)
        def _():
            acc_ref[...] += jnp.sum(x, axis=1)

        @pl.when(k == n_k - 1)
        def _():
            valid = red - k * t_r
            idx = jax.lax.broadcasted_iota(jnp.int32, x.shape, 1)
            acc_ref[...] += jnp.sum(jnp.where(idx < valid, x, 0.0), axis=1)
    else:
        acc_ref[...] += jnp.sum(x, axis=1)

    @pl.when(k == n_k - 1)
    def _():
        o_ref[...] = (acc_ref[...] * inv_r).astype(o_ref.dtype)


def _mean_3d_multi_inplace_kernel(x_ref, o_ref, **kw):
    # f32 output: accumulate directly in the resident output block (no scratch VMEM).
    _mean_3d_multi_kernel(x_ref, o_ref, o_ref, **kw)


# ----------------------------------------------------------------------------
# Tile selection (padding-aware)
# ----------------------------------------------------------------------------
def _choose_tiles_3d(outer, red, inner, dtype, target_bytes):
    item = jnp.dtype(dtype).itemsize
    sub = _sublane(dtype)

    # Lane tile: whole inner extent when its padded width is modest, else a 128-multiple.
    if _round_up(inner, _LANE) * item <= 8192:
        t_in = inner
    else:
        t_in = max(_LANE, _round_down(8192 // item, _LANE))
    w = _round_up(t_in, _LANE)
    # TODO(synk): for inner < 128 a contiguous (outer, R*inner) lane-dense layout with an
    # in-kernel strided partial sum would avoid wasting (1 - inner/128) of every vreg/DMA.

    red_pad = _round_up(red, sub)
    per_row = item * red_pad * w + item * w            # padded input row + output row
    max_rows = target_bytes // per_row
    if max_rows >= outer:
        return outer, red, t_in                        # single K step, full outer
    if max_rows >= sub:
        return _round_down(min(max_rows, 1024), sub), red, t_in   # single K step
    # Reduction does not fit one block: tile the reduced (sublane) axis.
    t_out = outer if outer < sub else sub
    acc_row = 4 * w                                    # f32 accumulator row
    budget = (target_bytes - t_out * (item * w + acc_row)) // (item * t_out * w)
    t_r = max(sub, _round_down(budget, sub))
    t_r = min(t_r, red_pad)
    if t_r >= red:
        t_r = red
    return t_out, t_r, t_in


def _choose_tiles_2d(outer, red, dtype, target_bytes):
    item = jnp.dtype(dtype).itemsize
    sub = _sublane(dtype)
    red_pad = _round_up(red, _LANE)

    per_row = item * red_pad + item * _LANE            # padded input row + padded output row
    max_rows = target_bytes // per_row
    if max_rows >= outer:
        return outer, red                              # single K step, full outer
    if max_rows >= sub:
        return _round_down(min(max_rows, 4096), sub), red
    # Reduction does not fit: tile the reduced (lane) axis.
    t_r = min(red_pad, 32 * _LANE)                     # <= 32 unrolled 128-lane chunk adds
    per_row = item * t_r + item * _LANE + 4 * _LANE    # input + output + f32 accumulator rows
    max_rows = target_bytes // per_row
    if max_rows >= outer:
        t_out = outer
    elif max_rows >= sub:
        t_out = _round_down(min(max_rows, 4096), sub)
    else:
        t_out = outer if outer < sub else sub
    if t_r >= red:
        t_r = red
    return t_out, t_r


def _split_for_megacore(outer, inner, t_out, t_in, sub):
    """Ensure >= 2 parallel output tiles so both TensorCores (v7x) get work."""
    if pl.cdiv(outer, t_out) * pl.cdiv(inner, t_in) >= 2:
        return t_out, t_in
    if outer >= 2 * sub:
        return _round_up(pl.cdiv(outer, 2), sub), t_in
    if inner >= 2 * _LANE:
        return t_out, _round_up(pl.cdiv(inner, 2), _LANE)
    return t_out, t_in


# ----------------------------------------------------------------------------
# Public wrapper
# ----------------------------------------------------------------------------
def mean_pallas(x: jax.Array, dim: int, *, target_block_bytes=None) -> jax.Array:
    """Pallas TPU equivalent of torch.mean(x, dim=dim)."""
    ndim = x.ndim
    if dim < 0:
        dim += ndim
    assert 0 <= dim < ndim
    shape = x.shape
    outer = math.prod(shape[:dim])
    red = shape[dim]
    inner = math.prod(shape[dim + 1:])
    out_shape_final = shape[:dim] + shape[dim + 1:]

    if red == 1:                          # mean over a length-1 axis == squeeze
        return x.reshape(out_shape_final)

    target, vmem_cap = _vmem_budget(target_block_bytes)
    dtype = x.dtype
    item = jnp.dtype(dtype).itemsize
    sub = _sublane(dtype)
    inv_r = 1.0 / red

    if inner == 1:
        # ---- last-axis reduction: reduced dim on the lane axis --------------
        x2 = x.reshape(outer, red)
        t_out, t_r = _choose_tiles_2d(outer, red, dtype, target)
        t_out, _ = _split_for_megacore(outer, 1, t_out, 1, sub)
        n_k = pl.cdiv(red, t_r)
        n_out = pl.cdiv(outer, t_out)

        if n_k == 1:
            kernel = functools.partial(_mean_last_single_kernel, inv_r=inv_r)
            grid = (n_out,)
            in_specs = [pl.BlockSpec((t_out, red), lambda i: (i, 0))]
            out_specs = pl.BlockSpec((t_out, 1), lambda i: (i, 0))
            scratch = []
            semantics = ("parallel",)
            vmem_blocks = [((t_out, red), dtype, 2), ((t_out, 1), dtype, 2)]
        else:
            needs_mask = (red % t_r) != 0
            kernel = functools.partial(_mean_last_multi_kernel, inv_r=inv_r, red=red,
                                       t_r=t_r, needs_mask=needs_mask)
            grid = (n_out, n_k)
            in_specs = [pl.BlockSpec((t_out, t_r), lambda i, k: (i, k))]
            out_specs = pl.BlockSpec((t_out, 1), lambda i, k: (i, 0))
            scratch = [pltpu.VMEM((t_out, _LANE), jnp.float32)]   # lane-dense accumulator
            semantics = ("parallel", "arbitrary")
            vmem_blocks = [((t_out, t_r), dtype, 2), ((t_out, 1), dtype, 2),
                           ((t_out, _LANE), jnp.float32, 1)]

        out2 = pl.pallas_call(
            kernel,
            out_shape=jax.ShapeDtypeStruct((outer, 1), dtype),
            grid_spec=pltpu.PrefetchScalarGridSpec(
                num_scalar_prefetch=0, grid=grid,
                in_specs=in_specs, out_specs=out_specs, scratch_shapes=scratch),
            compiler_params=pltpu.CompilerParams(
                dimension_semantics=semantics,
                vmem_limit_bytes=_vmem_limit_bytes(vmem_blocks, vmem_cap)),
            cost_estimate=pl.CostEstimate(
                flops=outer * red, transcendentals=0,
                bytes_accessed=(outer * red + outer) * item),
        )(x2)
        return out2.reshape(out_shape_final)

    # ---- general case: (outer, R, inner), reduce axis 1 --------------------
    x3 = x.reshape(outer, red, inner)
    t_out, t_r, t_in = _choose_tiles_3d(outer, red, inner, dtype, target)
    t_out, t_in = _split_for_megacore(outer, inner, t_out, t_in, sub)
    n_k = pl.cdiv(red, t_r)
    n_out = pl.cdiv(outer, t_out)
    n_in = pl.cdiv(inner, t_in)

    if n_k == 1:
        kernel = functools.partial(_mean_3d_single_kernel, inv_r=inv_r)
        grid = (n_out, n_in)
        in_specs = [pl.BlockSpec((t_out, red, t_in), lambda i, j: (i, 0, j))]
        out_specs = pl.BlockSpec((t_out, t_in), lambda i, j: (i, j))
        scratch = []
        semantics = ("parallel", "parallel")
        vmem_blocks = [((t_out, red, t_in), dtype, 2), ((t_out, t_in), dtype, 2)]
    else:
        needs_mask = (red % t_r) != 0
        common = dict(inv_r=inv_r, red=red, t_r=t_r, needs_mask=needs_mask)
        grid = (n_out, n_in, n_k)
        in_specs = [pl.BlockSpec((t_out, t_r, t_in), lambda i, j, k: (i, k, j))]
        out_specs = pl.BlockSpec((t_out, t_in), lambda i, j, k: (i, j))
        semantics = ("parallel", "parallel", "arbitrary")
        if dtype == jnp.float32:
            # Accumulate directly in the resident f32 output block (saves scratch VMEM).
            kernel = functools.partial(_mean_3d_multi_inplace_kernel, **common)
            scratch = []
            vmem_blocks = [((t_out, t_r, t_in), dtype, 2), ((t_out, t_in), dtype, 2)]
        else:
            kernel = functools.partial(_mean_3d_multi_kernel, **common)
            scratch = [pltpu.VMEM((t_out, t_in), jnp.float32)]
            vmem_blocks = [((t_out, t_r, t_in), dtype, 2), ((t_out, t_in), dtype, 2),
                           ((t_out, t_in), jnp.float32, 1)]

    out2 = pl.pallas_call(
        kernel,
        out_shape=jax.ShapeDtypeStruct((outer, inner), dtype),
        grid_spec=pltpu.PrefetchScalarGridSpec(
            num_scalar_prefetch=0, grid=grid,
            in_specs=in_specs, out_specs=out_specs, scratch_shapes=scratch),
        compiler_params=pltpu.CompilerParams(
            dimension_semantics=semantics,
            vmem_limit_bytes=_vmem_limit_bytes(vmem_blocks, vmem_cap)),
        cost_estimate=pl.CostEstimate(
            flops=outer * red * inner, transcendentals=0,
            bytes_accessed=(outer * red * inner + outer * inner) * item),
    )(x3)
    return out2.reshape(out_shape_final)


if __name__ == "__main__":
    key = jax.random.PRNGKey(0)
    k1, k2, k3, k4 = jax.random.split(key, 4)

    # 1) Mean(dim=1) over an NCHW-like input (the module's typical use).
    x = jax.random.normal(k1, (2, 4, 16, 16), dtype=jnp.float32)
    out = jax.block_until_ready(mean_pallas(x, 1))
    ref = jnp.mean(x, axis=1)
    assert out.shape == ref.shape and out.dtype == ref.dtype
    assert jnp.allclose(out, ref, atol=1e-5, rtol=1e-5), "mismatch (dim=1)"

    # 2) Last-axis reduction path (reduced dim on lanes, single-K scratch-free kernel).
    out = jax.block_until_ready(mean_pallas(x, -1))
    ref = jnp.mean(x, axis=-1)
    assert out.shape == ref.shape
    assert jnp.allclose(out, ref, atol=1e-5, rtol=1e-5), "mismatch (dim=-1)"

    # 3) Multi-step masked reduction, f32: accumulates in the resident output block.
    y = jax.random.normal(k2, (4, 611, 128), dtype=jnp.float32)
    out = jax.block_until_ready(mean_pallas(y, 1, target_block_bytes=64 * 1024))
    ref = jnp.mean(y, axis=1)
    assert jnp.allclose(out, ref, atol=1e-4, rtol=1e-4), "mismatch (multi-K f32)"

    # 4) Multi-step masked reduction, bf16: f32 scratch accumulator + 16-row sublane tiles.
    yb = jax.random.normal(k3, (4, 611, 128), dtype=jnp.bfloat16)
    out = jax.block_until_ready(mean_pallas(yb, 1, target_block_bytes=64 * 1024))
    ref = jnp.mean(yb.astype(jnp.float32), axis=1)
    assert jnp.allclose(out.astype(jnp.float32), ref, atol=5e-3, rtol=5e-3), "mismatch (bf16)"

    # 5) Multi-step last-axis reduction with a masked tail (lane-dense accumulator path).
    z = jax.random.normal(k4, (16, 5000), dtype=jnp.float32)
    out = jax.block_until_ready(mean_pallas(z, -1, target_block_bytes=64 * 1024))
    ref = jnp.mean(z, axis=-1)
    assert jnp.allclose(out, ref, atol=1e-4, rtol=1e-4), "mismatch (multi-K last-axis)"

    print("KERNEL_OK")
</pallas_src>

<mosaic_0001>
module attributes {stable_mosaic.version = 11 : i64} {
  func.func @_mean_3d_single_kernel(%arg0: i32, %arg1: i32, %arg2: memref<2x4x128xf32, #tpu.memory_space<vmem>>, %arg3: memref<2x128xf32, #tpu.memory_space<vmem>>) attributes {dimension_semantics = [#tpu.dimension_semantics<parallel>, #tpu.dimension_semantics<parallel>], iteration_bounds = array<i64: 1, 2>, scalar_prefetch = 0 : i64, scratch_operands = 0 : i64, tpu.core_type = #tpu.core_type<tc>, window_params = [{transform_indices = @transform_0, window_bounds = array<i64: 2, 4, 128>}, {transform_indices = @transform_1, window_bounds = array<i64: 2, 128>}]} {
    %c0 = arith.constant 0 : index
    %c0_0 = arith.constant 0 : index
    %c0_1 = arith.constant 0 : index
    %0 = vector.load %arg2[%c0, %c0_0, %c0_1] : memref<2x4x128xf32, #tpu.memory_space<vmem>>, vector<2x4x128xf32>
    %cst = arith.constant dense<0.000000e+00> : vector<2x128xf32>
    %1 = vector.multi_reduction <add>, %0, %cst [1] : vector<2x4x128xf32> to vector<2x128xf32>
    %cst_2 = arith.constant 2.500000e-01 : f32
    %2 = vector.broadcast %cst_2 : f32 to vector<2x128xf32>
    %3 = arith.mulf %1, %2 : vector<2x128xf32>
    %c0_3 = arith.constant 0 : index
    %c0_4 = arith.constant 0 : index
    %4 = vector.load %arg3[%c0_3, %c0_4] : memref<2x128xf32, #tpu.memory_space<vmem>>, vector<2x128xf32>
    tpu.vector_store %arg3[%c0_3, %c0_4], %3 {strides = array<i32>} : memref<2x128xf32, #tpu.memory_space<vmem>>, vector<2x128xf32>,
    return
  }
  func.func @transform_0(%arg0: i32, %arg1: i32) -> (i32, i32, i32) {
    %c0_i32 = arith.constant 0 : i32
    %c0_i32_0 = arith.constant 0 : i32
    return %arg0, %c0_i32, %arg1 : i32, i32, i32
  }
  func.func @transform_1(%arg0: i32, %arg1: i32) -> (i32, i32) {
    %c0_i32 = arith.constant 0 : i32
    return %arg0, %arg1 : i32, i32
  }
}

</mosaic_0001>

<llo_original>
// kernel: tpu_custom_call.1
$region0: #{tpu_custom_call.1}
  #allocation0 [shape = 'u32[]', space=smem, size = 0x4, offset = 0x4, fixed_abs, tag = 'smem constant byte address 0x4 - core index']
  #allocation1 [shape = 'u32[144,128]{1,0:T(1,128)}', space=vmem, size = 0x12000, scoped, tag = 'internal scratch']
  %s0 = inlined_call_operand.hbm [shape: f32[2,4,256], index: 0, kind: input, shape index: {}]
  %s1 = inlined_call_operand.hbm [shape: f32[2,256], index: 1, kind: output, shape index: {}]
  %s2 = sld [smem:[#allocation0]]
  $region41: #{tpu_custom_call.1} parent=0
    _
  %s4 = ssub.s32 1, %s2
  %s5 = scalar_select 0, %s4, %s2
  $region1: #{tpu_custom_call.1} parent=0
    #allocation2 [shape = 'u8[8192]{0}', space=vmem, size = 0x2000, scoped, tag = 'input window, operand 0']
    #allocation3 [shape = 's32[2]{0}', space=sflag, size = 0x8, scoped, tag = 'scoped memory for tpu_custom_call.1']
    #allocation4 [shape = 's32[2]{0}', space=sflag, size = 0x8, scoped, tag = 'scoped memory for tpu_custom_call.1']
    #allocation5 [shape = 'u8[2048]{0}', space=vmem, size = 0x800, scoped, tag = 'output window, operand 0']
    %6 = vsyncpa [#allocation3], 0
    %s7 = scalar_lea.sflag [#allocation3], 1
    %8 = vsyncpa %s7, 0
    %9 = vsyncpa [#allocation4], 0
    %s10 = scalar_lea.sflag [#allocation4], 1
    %11 = vsyncpa %s10, 0
    loop: start=0, step=1, limit=4
    $region2: #{tpu_custom_call.1} parent=1 // loop_pre_header
      _
    $region3: #{tpu_custom_call.1} parent=1 // loop_header
      %s13 = sphi 0, %s17
      %p14 = scmp.ge.s32.totalorder %s13, 4
      %s20 = sphi 0, %s32
      %s21 = sphi 0, %s28
      %s22 = sphi 0, %s20
      %s23 = sphi 0, %s21
      %s24 = sphi 0, %s22
      %s25 = sphi 0, %s23
      %s37 = sphi 0, %s39
      %s40 = sphi 0, %s37
      %s41 = sphi 0, %s40
      %s57 = sphi 0, %s41
      %s65 = sphi 0, %s67
      %s68 = sphi 0, %s65
      %s69 = sphi 0, %s68
      %s85 = sphi 0, %s69
    $region4: #{tpu_custom_call.1} parent=1 // loop_header_branch
      %16 = sbr.rel (%p14) target = $region8
    $region5: #{tpu_custom_call.1} parent=1 // loop_body
      %s18 = ssub.s32 %s13, 1
      %s19 = ssub.s32 %s13, 2
      %s26 = sadd.s32 1, %s21
      %p27 = scmp.ge.s32.totalorder %s26, 2
      %s28 = scalar_select %p27, 0, %s26
      %s29 = sadd.s32 1, %s20
      %s30 = scalar_select %p27, %s29, %s20
      %p31 = scmp.ge.s32.totalorder %s30, 1
      %s32 = scalar_select %p31, 0, %s30
      %s33 = ssub.s32 %s20, %s32
      %s34 = ssub.s32 %s21, %s28
      %s35 = sor.u32 %s33, %s34
      %p36 = scmp.eq.s32.totalorder %s35, 0
      %s38 = sadd.s32 %s37, 1
      %s39 = scalar_select %p36, %s37, %s38
      %p42 = pneg %p36
      %p43 = scmp.eq.s32.totalorder %s13, 1
      %p44 = por %p42, %p43
      %p45 = scmp.ne.s32.totalorder %s37, %s40
      %p46 = scmp.eq.s32.totalorder %s13, 0
      %p47 = por %p45, %p46
      %p48 = scmp.ne.s32.totalorder %s37, %s40
      %p49 = scmp.eq.s32.totalorder %s18, 1
      %p50 = por %p48, %p49
      %p51 = scmp.ne.s32.totalorder %s40, %s41
      %p52 = scmp.eq.s32.totalorder %s18, 0
      %p53 = por %p51, %p52
      %p54 = scmp.ne.s32.totalorder %s40, %s41
      %p55 = scmp.eq.s32.totalorder %s19, 1
      %p56 = por %p54, %p55
      %p58 = scmp.ne.s32.totalorder %s41, %s57
      %p59 = scmp.eq.s32.totalorder %s19, 0
      %p60 = por %p58, %p59
      %s61 = ssub.s32 %s20, %s32
      %s62 = ssub.s32 %s21, %s28
      %s63 = sor.u32 %s61, %s62
      %p64 = scmp.eq.s32.totalorder %s63, 0
      %s66 = sadd.s32 %s65, 1
      %s67 = scalar_select %p64, %s65, %s66
      %p70 = pneg %p64
      %p71 = scmp.eq.s32.totalorder %s13, 1
      %p72 = por %p70, %p71
      %p73 = scmp.ne.s32.totalorder %s65, %s68
      %p74 = scmp.eq.s32.totalorder %s13, 0
      %p75 = por %p73, %p74
      %p76 = scmp.ne.s32.totalorder %s65, %s68
      %p77 = scmp.eq.s32.totalorder %s18, 1
      %p78 = por %p76, %p77
      %p79 = scmp.ne.s32.totalorder %s68, %s69
      %p80 = scmp.eq.s32.totalorder %s18, 0
      %p81 = por %p79, %p80
      %p82 = scmp.ne.s32.totalorder %s68, %s69
      %p83 = scmp.eq.s32.totalorder %s19, 1
      %p84 = por %p82, %p83
      %p86 = scmp.ne.s32.totalorder %s69, %s85
      %p87 = scmp.eq.s32.totalorder %s19, 0
      %p88 = por %p86, %p87
      %p89 = scmp.le.s32.totalorder 1, %s13
      %p90 = scmp.lt.s32.totalorder %s13, 3
      %p91 = pnand %p89, %p90
      %p92 = pneg %p91
      // Predicated region
      $region9: #{tpu_custom_call.1} parent=5 // pred_check
        _
      $region10: #{tpu_custom_call.1} parent=5 // pred_check_branch
        %94 = sbr.rel (%p91) target = $region12
      $region11: #{tpu_custom_call.1} parent=5 // pred_region
        %s95 = ssub.s32 %s13, 1
      $region12: #{tpu_custom_call.1} parent=5 // pred_fallthru
        _
      %p96 = scmp.lt.s32.totalorder %s13, 2
      // Predicated region
      $region13: #{tpu_custom_call.1} parent=5 // pred_check
        %p97 = pneg %p96
      $region14: #{tpu_custom_call.1} parent=5 // pred_check_branch
        %99 = sbr.rel (%p97) target = $region16
      $region15: #{tpu_custom_call.1} parent=5 // pred_region
        // Predicated region
        $region17: #{tpu_custom_call.1} parent=15 // pred_check
          %p100 = pneg %p47
        $region18: #{tpu_custom_call.1} parent=15 // pred_check_branch
          %102 = sbr.rel (%p100) target = $region20
        $region19: #{tpu_custom_call.1} parent=15 // pred_region
          %s103 = sand.u32 %s37, 1
          %s104 = scalar_lea.sflag [#allocation3], %s103
          %s105 = sand.u32 %s37, 1
          %s106 = smul.addr %s105, 8
          %s107 = scalar_lea.vmem [#allocation2], %s106
          %s108 = smul.u32 2, %s20
          %s110 = ssub.s32 128, 128
          %111 = vsyncadd %s104, %s110
          %s112 = smul.addr %s108, 2
          %s113 = sadd.s32 %s21, %s112
          %s114 = smul.addr %s113, 64
          %s115 = scalar_lea.hbm %s0, %s114
          %s116 = sshll.u32 %s107, 4
          %s117 = int_to_ptr.vmem [resolvable:$true] %s116
          %122 = dma.hbm_to_vmem [thread:$0]  %s115, 128, %s117, %s104, 128, 64, 4
        $region20: #{tpu_custom_call.1} parent=15 // pred_fallthru
          _
      $region16: #{tpu_custom_call.1} parent=5 // pred_fallthru
        _
      %p123 = scmp.le.s32.totalorder 1, %s13
      %p124 = scmp.lt.s32.totalorder %s13, 3
      %p125 = pnand %p123, %p124
      %p126 = pneg %p125
      // Predicated region
      $region21: #{tpu_custom_call.1} parent=5 // pred_check
        _
      $region22: #{tpu_custom_call.1} parent=5 // pred_check_branch
        %128 = sbr.rel (%p125) target = $region24
      $region23: #{tpu_custom_call.1} parent=5 // pred_region
        %s129 = ssub.s32 %s13, 1
        %s130 = sand.u32 %s40, 1
        %s131 = scalar_lea.sflag [#allocation3], %s130
        %s132 = sand.u32 %s40, 1
        %s133 = smul.addr %s132, 8
        %s134 = scalar_lea.vmem [#allocation2], %s133
        // Predicated region
        $region25: #{tpu_custom_call.1} parent=23 // pred_check
          %p135 = pneg %p53
        $region26: #{tpu_custom_call.1} parent=23 // pred_check_branch
          %137 = sbr.rel (%p135) target = $region28
        $region27: #{tpu_custom_call.1} parent=23 // pred_region
          %138 = dma.done %s131, 128
        $region28: #{tpu_custom_call.1} parent=23 // pred_fallthru
          _
        %s139 = sand.u32 %s40, 1
        %s140 = scalar_lea.sflag [#allocation3], %s139
        %s141 = sand.u32 %s40, 1
        %s142 = smul.addr %s141, 8
        %s143 = scalar_lea.vmem [#allocation2], %s142
        %p144 = pneg %p53
        %p145 = pneg %p50
        %p146 = pneg %p81
        %p147 = pneg %p78
        %s148 = sand.u32 %s68, 1
        %s149 = scalar_lea.sflag [#allocation4], %s148
        %s150 = sand.u32 %s68, 1
        %s151 = smul.addr %s150, 2
        %s152 = scalar_lea.vmem [#allocation5], %s151
        %s153 = smul.u32 2, %s22
        %v154 = vld [vmem:[%s134] sm:$0xf]
        %v155 = vld [vmem:[%s134 + $0x4] sm:$0xf]
        %vm156 = vcmask 1043456
        %v157 = vsel %vm156, %v154, 0.0
        %v158 = vrot.slane %v157, 4
        %v159 = vadd.f32 %v157, %v158
        %v160 = vrot.slane %v159, 2
        %v161 = vadd.f32 %v159, %v160
        %v162 = vrot.slane %v161, 1
        %v163 = vadd.f32 %v161, %v162
        %v164 = vsel %vm156, %v155, 0.0
        %v165 = vrot.slane %v164, 4
        %v166 = vadd.f32 %v164, %v165
        %v167 = vrot.slane %v166, 2
        %v168 = vadd.f32 %v166, %v167
        %v169 = vrot.slane %v168, 1
        %v170 = vadd.f32 %v168, %v169
        %v171 = vmul.f32 %v163, 0.25
        %v172 = vmul.f32 %v170, 0.25
        %vm175 = vcmask 1041409
        %v176 = vsel %vm175, %v172, %v171
        %178 = vst [vmem:[%s152] sm:$0x3] %v176
        %s179 = sand.u32 %s68, 1
        %s180 = scalar_lea.sflag [#allocation4], %s179
        %s181 = sand.u32 %s68, 1
        %s182 = smul.addr %s181, 2
        %s183 = scalar_lea.vmem [#allocation5], %s182
        // Predicated region
        $region29: #{tpu_custom_call.1} parent=23 // pred_check
          %p184 = pneg %p78
        $region30: #{tpu_custom_call.1} parent=23 // pred_check_branch
          %186 = sbr.rel (%p184) target = $region32
        $region31: #{tpu_custom_call.1} parent=23 // pred_region
          %s188 = ssub.s32 32, 32
          %189 = vsyncadd %s180, %s188
          %s190 = smul.addr %s22, 2
          %s191 = sadd.s32 %s23, %s190
          %s192 = smul.addr %s191, 32
          %s193 = scalar_lea.hbm %s1, %s192
          %s195 = sshll.u32 %s183, 4
          %s196 = int_to_ptr.vmem [resolvable:$true] %s195
          %198 = dma.vmem_to_hbm [thread:$0]  %s196, 32, %s193, %s180
        $region32: #{tpu_custom_call.1} parent=23 // pred_fallthru
          _
      $region24: #{tpu_custom_call.1} parent=5 // pred_fallthru
        _
      %p199 = scmp.le.s32.totalorder 2, %s13
      // Predicated region
      $region33: #{tpu_custom_call.1} parent=5 // pred_check
        %p200 = pneg %p199
      $region34: #{tpu_custom_call.1} parent=5 // pred_check_branch
        %202 = sbr.rel (%p200) target = $region36
      $region35: #{tpu_custom_call.1} parent=5 // pred_region
        %s203 = ssub.s32 %s13, 2
        // Predicated region
        $region37: #{tpu_custom_call.1} parent=35 // pred_check
          %p204 = pneg %p84
        $region38: #{tpu_custom_call.1} parent=35 // pred_check_branch
          %206 = sbr.rel (%p204) target = $region40
        $region39: #{tpu_custom_call.1} parent=35 // pred_region
          %s207 = sand.u32 %s69, 1
          %s208 = scalar_lea.sflag [#allocation4], %s207
          %s209 = sand.u32 %s69, 1
          %s210 = smul.addr %s209, 2
          %s211 = scalar_lea.vmem [#allocation5], %s210
          %212 = dma.done %s208, 32
        $region40: #{tpu_custom_call.1} parent=35 // pred_fallthru
          _
      $region36: #{tpu_custom_call.1} parent=5 // pred_fallthru
        _
    $region6: #{tpu_custom_call.1} parent=1 // loop_footer
      %s17 = sadd.s32 1, %s13
    $region7: #{tpu_custom_call.1} parent=1 // loop_footer_branch
      %12 = sbr.rel target = $region3
    $region8: #{tpu_custom_call.1} parent=1 // loop_exit
      _
    %213 = vsyncpa [#allocation3], 1
    %s214 = scalar_lea.sflag [#allocation3], 1
    %215 = vsyncpa %s214, 1
    %216 = vsyncpa [#allocation4], 1
    %s217 = scalar_lea.sflag [#allocation4], 1
    %218 = vsyncpa %s217, 1

</llo_original>
